<compile_context>
chip_gen: v7x
topology: tpu7x:2x2x1
jax: 0.10.0
libtpu: 0.0.40
codegen_flags: <defaults>
</compile_context>

<pallas_src>
import functools

import jax
import jax.numpy as jnp
from jax.experimental import pallas as pl
from jax.experimental.pallas import tpu as pltpu


# Flipped to False (and cached) if pipeline_mode=pl.Buffered(1) is unsupported
# by the running JAX/Mosaic version.
_SINGLE_BUFFER_WEIGHTS_OK = True


def _round_up(a, m):
    return (a + m - 1) // m * m


def _cdiv(a, b):
    return -(-a // b)


def _vmem_capacity_bytes():
    try:
        cap = getattr(pltpu.get_tpu_info(), "vmem_capacity_bytes", None)
        if cap:
            return int(cap)
    except Exception:
        pass
    return 64 << 20  # conservative default: v7x physical VMEM per TensorCore


def _sub_chunks_for(tm):
    # Independent row sub-chunks let the LLO scheduler overlap the MXU matmuls of
    # chunk j+1 with the VPU/EUP epilogue (bias/ReLU/square/rsqrt/scale) of chunk j.
    return 2 if (tm >= 512 and tm % 16 == 0) else 1


def _vmem_estimate(tm, k_pad, f_pad, *, x_bytes, out_bytes, w_bytes,
                   weight_bufs, sub_chunks):
    return (2 * tm * k_pad * x_bytes                         # x tile (double-buffered)
            + weight_bufs * k_pad * k_pad * w_bytes          # W1 (resident)
            + weight_bufs * k_pad * f_pad * w_bytes          # W2 (resident)
            + weight_bufs * (k_pad + f_pad) * 4              # biases (f32)
            + 2 * tm * f_pad * out_bytes                     # output tile (double-buffered)
            + 2 * (tm // sub_chunks) * (k_pad + f_pad) * 4)  # live f32 h / f intermediates


def _pick_tm(n8, k_pad, f_pad, w_bytes, out_bytes, soft_budget):
    # Bigger row tiles for small contraction dims (step-overhead / DMA-bound),
    # smaller for large dims (MXU-bound; keep the f32 intermediates small).
    if k_pad <= 512:
        tm_cap = 1024
    elif k_pad <= 1024:
        tm_cap = 512
    else:
        tm_cap = 256
    g = _cdiv(n8, tm_cap)
    if g == 1 and n8 >= 512:
        g = 2  # v7x: a single >=512-row step would leave the second TensorCore idle
    tm = _round_up(_cdiv(n8, g), 8)
    # VMEM-driven shrink; never below 256 rows (v6e/v7x MXU M-dim floor).
    while tm > 256:
        est = _vmem_estimate(tm, k_pad, f_pad, x_bytes=4, out_bytes=out_bytes,
                             w_bytes=w_bytes, weight_bufs=1,
                             sub_chunks=_sub_chunks_for(tm))
        if est <= soft_budget:
            break
        g += 1
        tm = max(256, _round_up(_cdiv(n8, g), 8))
    return max(8, (tm // 8) * 8)


def _contrastive_head_kernel(x_ref, w1_ref, b1_ref, w2_ref, b2_ref, o_ref, *,
                             sub_chunks):
    # x_ref: (tm, Kp) f32/bf16; w1_ref: (Kp, Kp); b1_ref: (1, Kp) f32;
    # w2_ref: (Kp, Fp); b2_ref: (1, Fp) f32; o_ref: (tm, Fp).
    w1 = w1_ref[...]
    b1 = b1_ref[...]
    w2 = w2_ref[...]
    b2 = b2_ref[...]
    tm = x_ref.shape[0]
    sub = tm // sub_chunks
    for j in range(sub_chunks):                       # static unroll; chunks independent
        rows = pl.ds(j * sub, sub)
        x = x_ref[rows, :].astype(w1.dtype)           # in-kernel cast (VPU, hidden under MXU)
        h = jnp.dot(x, w1, preferred_element_type=jnp.float32)        # MXU, f32 acc
        h = jnp.maximum(h + b1, 0.0)                                   # bias + ReLU (f32)
        f = jnp.dot(h.astype(w2.dtype), w2,
                    preferred_element_type=jnp.float32)                # MXU, f32 acc
        f = f + b2
        # F.normalize(feat, dim=1): f / max(||f||, 1e-12) == f * rsqrt(max(sum f^2, 1e-24))
        sq = jnp.sum(f * f, axis=1, keepdims=True)                     # (sub, 1)
        inv = jax.lax.rsqrt(jnp.maximum(sq, 1e-24))                    # EUP
        o_ref[rows, :] = (f * inv).astype(o_ref.dtype)


def prepare_contrastive_head_params(w1, b1, w2, b2, compute_dtype=jnp.bfloat16):
    """Pad weights to lane-dense (multiple-of-128) shapes and cast ONCE.

    w1: (dim_in, dim_in), b1: (dim_in,), w2: (dim_in, feat_dim), b2: (feat_dim,).
    Weights are stored (in, out), i.e. transposed vs. PyTorch nn.Linear's (out, in).
    Do this at init so repeated calls incur no weight HBM passes.
    """
    dim_in = w1.shape[0]
    feat_dim = w2.shape[1]
    k_pad = _round_up(dim_in, 128)
    f_pad = _round_up(feat_dim, 128)
    w1p = jnp.pad(w1, ((0, k_pad - dim_in), (0, k_pad - dim_in))).astype(compute_dtype)
    b1p = jnp.pad(b1, (0, k_pad - dim_in)).astype(jnp.float32).reshape(1, k_pad)
    w2p = jnp.pad(w2, ((0, k_pad - dim_in), (0, f_pad - feat_dim))).astype(compute_dtype)
    b2p = jnp.pad(b2, (0, f_pad - feat_dim)).astype(jnp.float32).reshape(1, f_pad)
    return dict(w1p=w1p, b1p=b1p, w2p=w2p, b2p=b2p,
                dim_in=dim_in, feat_dim=feat_dim, k_pad=k_pad, f_pad=f_pad)


def contrastive_head_apply(x, params, *, out_dtype=jnp.float32, slice_output=True):
    """x: (N, dim_in).  Returns (N, feat_dim) L2-normalized features (or the padded
    (n_pad, f_pad) lane-dense array when slice_output=False)."""
    global _SINGLE_BUFFER_WEIGHTS_OK

    N, dim_in = x.shape
    if dim_in != params["dim_in"]:
        raise ValueError(f"x has dim_in={dim_in}, params expect {params['dim_in']}")
    k_pad, f_pad, feat_dim = params["k_pad"], params["f_pad"], params["feat_dim"]
    w1p, b1p, w2p, b2p = params["w1p"], params["b1p"], params["w2p"], params["b2p"]
    w_bytes = w1p.dtype.itemsize
    out_bytes = jnp.dtype(out_dtype).itemsize

    vmem_cap = _vmem_capacity_bytes()                  # 64 MiB v7x, 128 MiB v5e/v6e
    soft_budget = min(vmem_cap // 4, 32 << 20)         # prefer shrinking tm over big scoped VMEM

    n8 = _round_up(N, 8)
    tm = _pick_tm(n8, k_pad, f_pad, w_bytes, out_bytes, soft_budget)
    n_pad = _round_up(n8, tm)
    sub_chunks = _sub_chunks_for(tm)

    if n_pad != N or k_pad != dim_in:
        # A pad pass is needed anyway; fold the bf16 cast into it so the kernel
        # reads 2 B/elem instead of 4.  Zero padding leaves valid outputs unchanged.
        xp = jnp.pad(x, ((0, n_pad - N), (0, k_pad - dim_in))).astype(w1p.dtype)
    else:
        # No wrapper pass at all: kernel reads x directly (f32) and casts on the VPU.
        xp = x
    x_bytes = xp.dtype.itemsize

    kernel = functools.partial(_contrastive_head_kernel, sub_chunks=sub_chunks)

    def run(single_buffer_weights):
        w_kwargs = {}
        weight_bufs = 2
        if single_buffer_weights:
            # Constant block index -> single-buffer the resident weights/biases.
            w_kwargs = dict(pipeline_mode=pl.Buffered(1))
            weight_bufs = 1
        est = _vmem_estimate(tm, k_pad, f_pad, x_bytes=x_bytes, out_bytes=out_bytes,
                             w_bytes=w_bytes, weight_bufs=weight_bufs,
                             sub_chunks=sub_chunks)
        cp_kwargs = dict(dimension_semantics=("parallel",))
        if est > (14 << 20):  # above the smallest (v5e) scoped default: request just what we need
            cp_kwargs["vmem_limit_bytes"] = int(min(est + (4 << 20), vmem_cap // 2))
        in_specs = [
            pl.BlockSpec((tm, k_pad), lambda i: (i, 0)),                  # x row tile
            pl.BlockSpec((k_pad, k_pad), lambda i: (0, 0), **w_kwargs),   # W1 (resident)
            pl.BlockSpec((1, k_pad), lambda i: (0, 0), **w_kwargs),       # b1
            pl.BlockSpec((k_pad, f_pad), lambda i: (0, 0), **w_kwargs),   # W2 (resident)
            pl.BlockSpec((1, f_pad), lambda i: (0, 0), **w_kwargs),       # b2
        ]
        return pl.pallas_call(
            kernel,
            out_shape=jax.ShapeDtypeStruct((n_pad, f_pad), out_dtype),
            grid_spec=pltpu.PrefetchScalarGridSpec(
                num_scalar_prefetch=0,
                grid=(n_pad // tm,),
                in_specs=in_specs,
                out_specs=pl.BlockSpec((tm, f_pad), lambda i: (i, 0)),    # lane-dense store
            ),
            compiler_params=pltpu.CompilerParams(**cp_kwargs),
        )(xp, w1p, b1p, w2p, b2p)

    if _SINGLE_BUFFER_WEIGHTS_OK and hasattr(pl, "Buffered"):
        try:
            out = run(True)
        except Exception:
            _SINGLE_BUFFER_WEIGHTS_OK = False  # cache; fall back to default double-buffering
            out = run(False)
    else:
        out = run(False)

    if not slice_output:
        return out
    return out[:N, :feat_dim]


def contrastive_head(x, w1, b1, w2, b2, *, compute_dtype=jnp.bfloat16,
                     out_dtype=jnp.float32):
    """One-shot convenience wrapper (re-pads/casts weights every call; prefer
    prepare_contrastive_head_params + contrastive_head_apply for repeated use)."""
    params = prepare_contrastive_head_params(w1, b1, w2, b2, compute_dtype)
    return contrastive_head_apply(x, params, out_dtype=out_dtype)


def contrastive_head_ref(x, w1, b1, w2, b2, compute_dtype=jnp.float32):
    """Pure-JAX reference matching the PyTorch module (optionally with the same
    bf16 operand casting the kernel uses, for apples-to-apples comparison)."""
    xc = x.astype(compute_dtype)
    h = jnp.dot(xc, w1.astype(compute_dtype), preferred_element_type=jnp.float32) + b1
    h = jnp.maximum(h, 0.0)
    f = jnp.dot(h.astype(compute_dtype), w2.astype(compute_dtype),
                preferred_element_type=jnp.float32) + b2
    norm = jnp.maximum(jnp.linalg.norm(f, axis=1, keepdims=True), 1e-12)
    return f / norm


def _make_params(key, dim_in, feat_dim):
    kw1, kb1, kw2, kb2 = jax.random.split(key, 4)
    s = 1.0 / dim_in ** 0.5
    w1 = jax.random.normal(kw1, (dim_in, dim_in), jnp.float32) * s
    b1 = jax.random.normal(kb1, (dim_in,), jnp.float32) * 0.01
    w2 = jax.random.normal(kw2, (dim_in, feat_dim), jnp.float32) * s
    b2 = jax.random.normal(kb2, (feat_dim,), jnp.float32) * 0.01
    return w1, b1, w2, b2


if __name__ == "__main__":
    key = jax.random.PRNGKey(0)

    def check(N, dim_in, feat_dim, k, out_dtype=jnp.float32,
              tol_bf16=1e-4, tol_f32=3e-2):
        kx, kp = jax.random.split(k)
        x = jax.random.normal(kx, (N, dim_in), jnp.float32)
        w1, b1, w2, b2 = _make_params(kp, dim_in, feat_dim)
        params = prepare_contrastive_head_params(w1, b1, w2, b2)  # hoisted weight prep
        out = jax.block_until_ready(
            contrastive_head_apply(x, params, out_dtype=out_dtype))
        assert out.shape == (N, feat_dim), out.shape
        assert out.dtype == out_dtype, out.dtype
        o32 = out.astype(jnp.float32)
        ref_b = contrastive_head_ref(x, w1, b1, w2, b2, compute_dtype=jnp.bfloat16)
        ref_f = contrastive_head_ref(x, w1, b1, w2, b2, compute_dtype=jnp.float32)
        assert jnp.allclose(o32, ref_b, atol=tol_bf16, rtol=tol_bf16), \
            f"mismatch vs bf16 ref at ({N},{dim_in},{feat_dim})"
        assert jnp.allclose(o32, ref_f, atol=tol_f32, rtol=tol_f32), \
            f"mismatch vs f32 ref at ({N},{dim_in},{feat_dim})"

    k1, k2, k3, k4 = jax.random.split(key, 4)
    # 1) tiny shapes consistent with the module (column padding, single grid step).
    check(8, 32, 16, k1)
    # 2) aligned shapes: no wrapper pad/cast pass for x (kernel reads f32, casts on VPU).
    check(256, 128, 128, k2)
    # 3) multi-step parallel row grid + row/column padding + v7x two-core split rule.
    check(1040, 160, 72, k3)
    # 4) bf16 output mode (halves output HBM write traffic).
    check(8, 32, 16, k4, out_dtype=jnp.bfloat16, tol_bf16=1e-2)

    print("KERNEL_OK")
</pallas_src>

<mosaic_0001>
module attributes {stable_mosaic.version = 11 : i64} {
  func.func @_contrastive_head_kernel(%arg0: i32, %arg1: memref<8x128xbf16, #tpu.memory_space<vmem>>, %arg2: memref<128x128xbf16, #tpu.memory_space<vmem>>, %arg3: memref<1x128xf32, #tpu.memory_space<vmem>>, %arg4: memref<128x128xbf16, #tpu.memory_space<vmem>>, %arg5: memref<1x128xf32, #tpu.memory_space<vmem>>, %arg6: memref<8x128xf32, #tpu.memory_space<vmem>>) attributes {dimension_semantics = [#tpu.dimension_semantics<parallel>], iteration_bounds = array<i64: 1>, scalar_prefetch = 0 : i64, scratch_operands = 0 : i64, tpu.core_type = #tpu.core_type<tc>, window_params = [{transform_indices = @transform_0, window_bounds = array<i64: 8, 128>}, {pipeline_mode = #tpu.pipeline_mode<synchronous>, transform_indices = @transform_1, window_bounds = array<i64: 128, 128>}, {pipeline_mode = #tpu.pipeline_mode<synchronous>, transform_indices = @transform_2, window_bounds = array<i64: 1, 128>}, {pipeline_mode = #tpu.pipeline_mode<synchronous>, transform_indices = @transform_3, window_bounds = array<i64: 128, 128>}, {pipeline_mode = #tpu.pipeline_mode<synchronous>, transform_indices = @transform_4, window_bounds = array<i64: 1, 128>}, {transform_indices = @transform_5, window_bounds = array<i64: 8, 128>}]} {
    %c0 = arith.constant 0 : index
    %c0_0 = arith.constant 0 : index
    %0 = vector.load %arg2[%c0, %c0_0] : memref<128x128xbf16, #tpu.memory_space<vmem>>, vector<128x128xbf16>
    %c0_1 = arith.constant 0 : index
    %c0_2 = arith.constant 0 : index
    %1 = vector.load %arg3[%c0_1, %c0_2] : memref<1x128xf32, #tpu.memory_space<vmem>>, vector<1x128xf32>
    %c0_3 = arith.constant 0 : index
    %c0_4 = arith.constant 0 : index
    %2 = vector.load %arg4[%c0_3, %c0_4] : memref<128x128xbf16, #tpu.memory_space<vmem>>, vector<128x128xbf16>
    %c0_5 = arith.constant 0 : index
    %c0_6 = arith.constant 0 : index
    %3 = vector.load %arg5[%c0_5, %c0_6] : memref<1x128xf32, #tpu.memory_space<vmem>>, vector<1x128xf32>
    %c0_7 = arith.constant 0 : index
    %c0_8 = arith.constant 0 : index
    %4 = vector.load %arg1[%c0_7, %c0_8] : memref<8x128xbf16, #tpu.memory_space<vmem>>, vector<8x128xbf16>
    %cst = arith.constant dense<0.000000e+00> : vector<8x128xf32>
    %5 = tpu.matmul %4, %0, %cst {dimension_numbers = #tpu.dot_dimension_numbers<[1], [0], [0], [1], [0, 0, 1, 1], [], []>} : vector<8x128xbf16>, vector<128x128xbf16>, vector<8x128xf32> -> vector<8x128xf32>
    %6 = vector.broadcast %1 : vector<1x128xf32> to vector<8x128xf32>
    %7 = arith.addf %5, %6 : vector<8x128xf32>
    %cst_9 = arith.constant 0.000000e+00 : f32
    %8 = vector.broadcast %cst_9 : f32 to vector<8x128xf32>
    %9 = arith.maximumf %7, %8 : vector<8x128xf32>
    %10 = arith.truncf %9 : vector<8x128xf32> to vector<8x128xbf16>
    %cst_10 = arith.constant dense<0.000000e+00> : vector<8x128xf32>
    %11 = tpu.matmul %10, %2, %cst_10 {dimension_numbers = #tpu.dot_dimension_numbers<[1], [0], [0], [1], [0, 0, 1, 1], [], []>} : vector<8x128xbf16>, vector<128x128xbf16>, vector<8x128xf32> -> vector<8x128xf32>
    %12 = vector.broadcast %3 : vector<1x128xf32> to vector<8x128xf32>
    %13 = arith.addf %11, %12 : vector<8x128xf32>
    %14 = arith.mulf %13, %13 : vector<8x128xf32>
    %cst_11 = arith.constant dense<0.000000e+00> : vector<8xf32>
    %15 = vector.multi_reduction <add>, %14, %cst_11 [1] : vector<8x128xf32> to vector<8xf32>
    %16 = vector.shape_cast %15 : vector<8xf32> to vector<8x1xf32>
    %cst_12 = arith.constant 1.000000e-24 : f32
    %17 = vector.broadcast %cst_12 : f32 to vector<8x1xf32>
    %18 = arith.maximumf %16, %17 : vector<8x1xf32>
    %19 = math.rsqrt %18 : vector<8x1xf32>
    %20 = vector.broadcast %19 : vector<8x1xf32> to vector<8x128xf32>
    %21 = arith.mulf %13, %20 : vector<8x128xf32>
    %c0_13 = arith.constant 0 : index
    %c0_14 = arith.constant 0 : index
    %22 = vector.load %arg6[%c0_13, %c0_14] : memref<8x128xf32, #tpu.memory_space<vmem>>, vector<8x128xf32>
    tpu.vector_store %arg6[%c0_13, %c0_14], %21 {strides = array<i32>} : memref<8x128xf32, #tpu.memory_space<vmem>>, vector<8x128xf32>,
    return
  }
  func.func @transform_0(%arg0: i32) -> (i32, i32) {
    %c0_i32 = arith.constant 0 : i32
    %c0_i32_0 = arith.constant 0 : i32
    return %arg0, %c0_i32 : i32, i32
  }
  func.func @transform_1(%arg0: i32) -> (i32, i32) {
    %c0_i32 = arith.constant 0 : i32
    %c0_i32_0 = arith.constant 0 : i32
    %c0_i32_1 = arith.constant 0 : i32
    return %c0_i32, %c0_i32_0 : i32, i32
  }
  func.func @transform_2(%arg0: i32) -> (i32, i32) {
    %c0_i32 = arith.constant 0 : i32
    %c0_i32_0 = arith.constant 0 : i32
    %c0_i32_1 = arith.constant 0 : i32
    return %c0_i32, %c0_i32_0 : i32, i32
  }
  func.func @transform_3(%arg0: i32) -> (i32, i32) {
    %c0_i32 = arith.constant 0 : i32
    %c0_i32_0 = arith.constant 0 : i32
    %c0_i32_1 = arith.constant 0 : i32
    return %c0_i32, %c0_i32_0 : i32, i32
  }
  func.func @transform_4(%arg0: i32) -> (i32, i32) {
    %c0_i32 = arith.constant 0 : i32
    %c0_i32_0 = arith.constant 0 : i32
    %c0_i32_1 = arith.constant 0 : i32
    return %c0_i32, %c0_i32_0 : i32, i32
  }
  func.func @transform_5(%arg0: i32) -> (i32, i32) {
    %c0_i32 = arith.constant 0 : i32
    %c0_i32_0 = arith.constant 0 : i32
    return %arg0, %c0_i32 : i32, i32
  }
}

module attributes {stable_mosaic.version = 11 : i64} {
  func.func @_contrastive_head_kernel(%arg0: i32, %arg1: memref<8x128xbf16, #tpu.memory_space<vmem>>, %arg2: memref<128x128xbf16, #tpu.memory_space<vmem>>, %arg3: memref<1x128xf32, #tpu.memory_space<vmem>>, %arg4: memref<128x128xbf16, #tpu.memory_space<vmem>>, %arg5: memref<1x128xf32, #tpu.memory_space<vmem>>, %arg6: memref<8x128xf32, #tpu.memory_space<vmem>>) attributes {dimension_semantics = [#tpu.dimension_semantics<parallel>], iteration_bounds = array<i64: 1>, scalar_prefetch = 0 : i64, scratch_operands = 0 : i64, tpu.core_type = #tpu.core_type<tc>, window_params = [{transform_indices = @transform_0, window_bounds = array<i64: 8, 128>}, {pipeline_mode = #tpu.pipeline_mode<synchronous>, transform_indices = @transform_1, window_bounds = array<i64: 128, 128>}, {pipeline_mode = #tpu.pipeline_mode<synchronous>, transform_indices = @transform_2, window_bounds = array<i64: 1, 128>}, {pipeline_mode = #tpu.pipeline_mode<synchronous>, transform_indices = @transform_3, window_bounds = array<i64: 128, 128>}, {pipeline_mode = #tpu.pipeline_mode<synchronous>, transform_indices = @transform_4, window_bounds = array<i64: 1, 128>}, {transform_indices = @transform_5, window_bounds = array<i64: 8, 128>}]} {
    %c0 = arith.constant 0 : index
    %c0_0 = arith.constant 0 : index
    %0 = vector.load %arg2[%c0, %c0_0] : memref<128x128xbf16, #tpu.memory_space<vmem>>, vector<128x128xbf16>
    %c0_1 = arith.constant 0 : index
    %c0_2 = arith.constant 0 : index
    %1 = vector.load %arg3[%c0_1, %c0_2] : memref<1x128xf32, #tpu.memory_space<vmem>>, vector<1x128xf32>
    %c0_3 = arith.constant 0 : index
    %c0_4 = arith.constant 0 : index
    %2 = vector.load %arg4[%c0_3, %c0_4] : memref<128x128xbf16, #tpu.memory_space<vmem>>, vector<128x128xbf16>
    %c0_5 = arith.constant 0 : index
    %c0_6 = arith.constant 0 : index
    %3 = vector.load %arg5[%c0_5, %c0_6] : memref<1x128xf32, #tpu.memory_space<vmem>>, vector<1x128xf32>
    %c0_7 = arith.constant 0 : index
    %c0_8 = arith.constant 0 : index
    %4 = vector.load %arg1[%c0_7, %c0_8] : memref<8x128xbf16, #tpu.memory_space<vmem>>, vector<8x128xbf16>
    %cst = arith.constant dense<0.000000e+00> : vector<8x128xf32>
    %5 = tpu.matmul %4, %0, %cst {dimension_numbers = #tpu.dot_dimension_numbers<[1], [0], [0], [1], [0, 0, 1, 1], [], []>} : vector<8x128xbf16>, vector<128x128xbf16>, vector<8x128xf32> -> vector<8x128xf32>
    %6 = vector.broadcast %1 : vector<1x128xf32> to vector<8x128xf32>
    %7 = arith.addf %5, %6 : vector<8x128xf32>
    %cst_9 = arith.constant 0.000000e+00 : f32
    %8 = vector.broadcast %cst_9 : f32 to vector<8x128xf32>
    %9 = arith.maximumf %7, %8 : vector<8x128xf32>
    %10 = arith.truncf %9 : vector<8x128xf32> to vector<8x128xbf16>
    %cst_10 = arith.constant dense<0.000000e+00> : vector<8x128xf32>
    %11 = tpu.matmul %10, %2, %cst_10 {dimension_numbers = #tpu.dot_dimension_numbers<[1], [0], [0], [1], [0, 0, 1, 1], [], []>} : vector<8x128xbf16>, vector<128x128xbf16>, vector<8x128xf32> -> vector<8x128xf32>
    %12 = vector.broadcast %3 : vector<1x128xf32> to vector<8x128xf32>
    %13 = arith.addf %11, %12 : vector<8x128xf32>
    %14 = arith.mulf %13, %13 : vector<8x128xf32>
    %cst_11 = arith.constant dense<0.000000e+00> : vector<8xf32>
    %15 = vector.multi_reduction <add>, %14, %cst_11 [1] : vector<8x128xf32> to vector<8xf32>
    %16 = vector.shape_cast %15 : vector<8xf32> to vector<8x1xf32>
    %cst_12 = arith.constant 1.000000e-24 : f32
    %17 = vector.broadcast %cst_12 : f32 to vector<8x1xf32>
    %18 = arith.maximumf %16, %17 : vector<8x1xf32>
    %19 = math.rsqrt %18 : vector<8x1xf32>
    %20 = vector.broadcast %19 : vector<8x1xf32> to vector<8x128xf32>
    %21 = arith.mulf %13, %20 : vector<8x128xf32>
    %c0_13 = arith.constant 0 : index
    %c0_14 = arith.constant 0 : index
    %22 = vector.load %arg6[%c0_13, %c0_14] : memref<8x128xf32, #tpu.memory_space<vmem>>, vector<8x128xf32>
    tpu.vector_store %arg6[%c0_13, %c0_14], %21 {strides = array<i32>} : memref<8x128xf32, #tpu.memory_space<vmem>>, vector<8x128xf32>,
    return
  }
  func.func @transform_0(%arg0: i32) -> (i32, i32) {
    %c0_i32 = arith.constant 0 : i32
    %c0_i32_0 = arith.constant 0 : i32
    return %arg0, %c0_i32 : i32, i32
  }
  func.func @transform_1(%arg0: i32) -> (i32, i32) {
    %c0_i32 = arith.constant 0 : i32
    %c0_i32_0 = arith.constant 0 : i32
    %c0_i32_1 = arith.constant 0 : i32
    return %c0_i32, %c0_i32_0 : i32, i32
  }
  func.func @transform_2(%arg0: i32) -> (i32, i32) {
    %c0_i32 = arith.constant 0 : i32
    %c0_i32_0 = arith.constant 0 : i32
    %c0_i32_1 = arith.constant 0 : i32
    return %c0_i32, %c0_i32_0 : i32, i32
  }
  func.func @transform_3(%arg0: i32) -> (i32, i32) {
    %c0_i32 = arith.constant 0 : i32
    %c0_i32_0 = arith.constant 0 : i32
    %c0_i32_1 = arith.constant 0 : i32
    return %c0_i32, %c0_i32_0 : i32, i32
  }
  func.func @transform_4(%arg0: i32) -> (i32, i32) {
    %c0_i32 = arith.constant 0 : i32
    %c0_i32_0 = arith.constant 0 : i32
    %c0_i32_1 = arith.constant 0 : i32
    return %c0_i32, %c0_i32_0 : i32, i32
  }
  func.func @transform_5(%arg0: i32) -> (i32, i32) {
    %c0_i32 = arith.constant 0 : i32
    %c0_i32_0 = arith.constant 0 : i32
    return %arg0, %c0_i32 : i32, i32
  }
}

</mosaic_0001>

<llo_original>
// kernel: tpu_custom_call.1
$region0: #{tpu_custom_call.1}
  #allocation0 [shape = 'u32[]', space=smem, size = 0x4, offset = 0x4, fixed_abs, tag = 'smem constant byte address 0x4 - core index']
  #allocation1 [shape = 'u32[144,128]{1,0:T(1,128)}', space=vmem, size = 0x12000, scoped, tag = 'internal scratch']
  %s0 = inlined_call_operand.hbm [shape: bf16[8,128], index: 0, kind: input, shape index: {}]
  %s1 = inlined_call_operand.hbm [shape: bf16[128,128], index: 1, kind: input, shape index: {}]
  %s2 = inlined_call_operand.vmem [shape: f32[1,128], index: 2, kind: input, shape index: {}]
  %s3 = inlined_call_operand.hbm [shape: bf16[128,128], index: 3, kind: input, shape index: {}]
  %s4 = inlined_call_operand.vmem [shape: f32[1,128], index: 4, kind: input, shape index: {}]
  %s5 = inlined_call_operand.hbm [shape: f32[8,128], index: 5, kind: output, shape index: {}]
  %s6 = sld [smem:[#allocation0]]
  $region42: #{tpu_custom_call.1} parent=0
    _
  %s8 = ssub.s32 1, %s6
  %s9 = scalar_select 0, %s8, %s6
  $region1: #{tpu_custom_call.1} parent=0
    #allocation2 [shape = 'u8[2048]{0}', space=vmem, size = 0x800, scoped, tag = 'input window, operand 0, single buffered']
    #allocation3 [shape = 's32[1]{0}', space=sflag, size = 0x4, scoped, tag = 'scoped memory for tpu_custom_call.1']
    #allocation4 [shape = 's32[1]{0}', space=sflag, size = 0x4, scoped, tag = 'scoped memory for tpu_custom_call.1']
    #allocation5 [shape = 'u8[32768]{0}', space=vmem, size = 0x8000, scoped, tag = 'input window, operand 1, single buffered']
    #allocation6 [shape = 's32[1]{0}', space=sflag, size = 0x4, scoped, tag = 'scoped memory for tpu_custom_call.1']
    #allocation7 [shape = 'u8[32768]{0}', space=vmem, size = 0x8000, scoped, tag = 'input window, operand 3, single buffered']
    #allocation8 [shape = 'u8[4096]{0}', space=vmem, size = 0x1000, scoped, tag = 'output window, operand 0, single buffered']
    %10 = vsyncpa [#allocation3], 0
    %11 = vsyncpa [#allocation6], 0
    %12 = vsyncpa [#allocation4], 0
    // Predicated region
    $region2: #{tpu_custom_call.1} parent=1 // pred_check
      _
    $region3: #{tpu_custom_call.1} parent=1 // pred_check_branch
      %14 = sbr.rel (0) target = $region5
    $region4: #{tpu_custom_call.1} parent=1 // pred_region
      %s16 = ssub.s32 64, 64
      %17 = vsyncadd [#allocation3], %s16
      %s19 = sshll.u32 [#allocation2], 4
      %s20 = int_to_ptr.vmem [resolvable:$true] %s19
      %22 = dma.hbm_to_vmem [thread:$0]  %s0, 64, %s20, [#allocation3]
    $region5: #{tpu_custom_call.1} parent=1 // pred_fallthru
      _
    // Predicated region
    $region6: #{tpu_custom_call.1} parent=1 // pred_check
      _
    $region7: #{tpu_custom_call.1} parent=1 // pred_check_branch
      %24 = sbr.rel (0) target = $region9
    $region8: #{tpu_custom_call.1} parent=1 // pred_region
      %s26 = ssub.s32 1024, 1024
      %27 = vsyncadd [#allocation6], %s26
      %s28 = sshll.u32 [#allocation5], 4
      %s29 = int_to_ptr.vmem [resolvable:$true] %s28
      %34 = dma.hbm_to_vmem [thread:$0]  %s1, 1024, %s29, [#allocation6], 64, 64, 4
    $region9: #{tpu_custom_call.1} parent=1 // pred_fallthru
      _
    // Predicated region
    $region10: #{tpu_custom_call.1} parent=1 // pred_check
      _
    $region11: #{tpu_custom_call.1} parent=1 // pred_check_branch
      %36 = sbr.rel (0) target = $region13
    $region12: #{tpu_custom_call.1} parent=1 // pred_region
      _
    $region13: #{tpu_custom_call.1} parent=1 // pred_fallthru
      _
    // Predicated region
    $region14: #{tpu_custom_call.1} parent=1 // pred_check
      _
    $region15: #{tpu_custom_call.1} parent=1 // pred_check_branch
      %38 = sbr.rel (0) target = $region17
    $region16: #{tpu_custom_call.1} parent=1 // pred_region
      %s40 = ssub.s32 1024, 1024
      %41 = vsyncadd [#allocation6], %s40
      %s42 = sshll.u32 [#allocation7], 4
      %s43 = int_to_ptr.vmem [resolvable:$true] %s42
      %48 = dma.hbm_to_vmem [thread:$0]  %s3, 1024, %s43, [#allocation6], 64, 64, 4
    $region17: #{tpu_custom_call.1} parent=1 // pred_fallthru
      _
    // Predicated region
    $region18: #{tpu_custom_call.1} parent=1 // pred_check
      _
    $region19: #{tpu_custom_call.1} parent=1 // pred_check_branch
      %50 = sbr.rel (0) target = $region21
    $region20: #{tpu_custom_call.1} parent=1 // pred_region
      _
    $region21: #{tpu_custom_call.1} parent=1 // pred_fallthru
      _
    // Predicated region
    $region22: #{tpu_custom_call.1} parent=1 // pred_check
      _
    $region23: #{tpu_custom_call.1} parent=1 // pred_check_branch
      %52 = sbr.rel (0) target = $region25
    $region24: #{tpu_custom_call.1} parent=1 // pred_region
      %53 = dma.done [#allocation3], 64
    $region25: #{tpu_custom_call.1} parent=1 // pred_fallthru
      _
    // Predicated region
    $region26: #{tpu_custom_call.1} parent=1 // pred_check
      _
    $region27: #{tpu_custom_call.1} parent=1 // pred_check_branch
      %55 = sbr.rel (0) target = $region29
    $region28: #{tpu_custom_call.1} parent=1 // pred_region
      %56 = dma.done [#allocation6], 1024
    $region29: #{tpu_custom_call.1} parent=1 // pred_fallthru
      _
    // Predicated region
    $region30: #{tpu_custom_call.1} parent=1 // pred_check
      _
    $region31: #{tpu_custom_call.1} parent=1 // pred_check_branch
      %58 = sbr.rel (0) target = $region33
    $region32: #{tpu_custom_call.1} parent=1 // pred_region
      %59 = dma.done [#allocation6], 1024
    $region33: #{tpu_custom_call.1} parent=1 // pred_fallthru
      _
    %v61 = vld [vmem:[#allocation5] sm:$0xf]
    %v62 = vld [vmem:[#allocation5 + $0x4] sm:$0xf]
    %v63 = vld [vmem:[#allocation5 + $0x8] sm:$0xf]
    %v64 = vld [vmem:[#allocation5 + $0xc] sm:$0xf]
    %v65 = vld [vmem:[#allocation5 + $0x10] sm:$0xf]
    %v66 = vld [vmem:[#allocation5 + $0x14] sm:$0xf]
    %v67 = vld [vmem:[#allocation5 + $0x18] sm:$0xf]
    %v68 = vld [vmem:[#allocation5 + $0x1c] sm:$0xf]
    %v69 = vld [vmem:[#allocation5 + $0x20] sm:$0xf]
    %v70 = vld [vmem:[#allocation5 + $0x24] sm:$0xf]
    %v71 = vld [vmem:[#allocation5 + $0x28] sm:$0xf]
    %v72 = vld [vmem:[#allocation5 + $0x2c] sm:$0xf]
    %v73 = vld [vmem:[#allocation5 + $0x30] sm:$0xf]
    %v74 = vld [vmem:[#allocation5 + $0x34] sm:$0xf]
    %v75 = vld [vmem:[#allocation5 + $0x38] sm:$0xf]
    %v76 = vld [vmem:[#allocation5 + $0x3c] sm:$0xf]
    %v77 = vld [vmem:[%s2] sm:$0x1]
    %v78 = vld [vmem:[#allocation7] sm:$0xf]
    %v79 = vld [vmem:[#allocation7 + $0x4] sm:$0xf]
    %v80 = vld [vmem:[#allocation7 + $0x8] sm:$0xf]
    %v81 = vld [vmem:[#allocation7 + $0xc] sm:$0xf]
    %v82 = vld [vmem:[#allocation7 + $0x10] sm:$0xf]
    %v83 = vld [vmem:[#allocation7 + $0x14] sm:$0xf]
    %v84 = vld [vmem:[#allocation7 + $0x18] sm:$0xf]
    %v85 = vld [vmem:[#allocation7 + $0x1c] sm:$0xf]
    %v86 = vld [vmem:[#allocation7 + $0x20] sm:$0xf]
    %v87 = vld [vmem:[#allocation7 + $0x24] sm:$0xf]
    %v88 = vld [vmem:[#allocation7 + $0x28] sm:$0xf]
    %v89 = vld [vmem:[#allocation7 + $0x2c] sm:$0xf]
    %v90 = vld [vmem:[#allocation7 + $0x30] sm:$0xf]
    %v91 = vld [vmem:[#allocation7 + $0x34] sm:$0xf]
    %v92 = vld [vmem:[#allocation7 + $0x38] sm:$0xf]
    %v93 = vld [vmem:[#allocation7 + $0x3c] sm:$0xf]
    %v94 = vld [vmem:[%s4] sm:$0x1]
    %v95 = vld [vmem:[#allocation2] sm:$0xf]
    %v97 = vlaneseq
    %v98 = vshrl.u32 %v97, 7
    %v99 = vsub.s32 0, %v98
    %v100 = vrot.slane %v77, %v99
    %v118 = vunpack.c.l.b16 %v61
    %v119 = vunpack.c.l.b16 %v62
    %v120 = vunpack.c.l.b16 %v63
    %v121 = vunpack.c.l.b16 %v64
    %v122 = vunpack.c.l.b16 %v65
    %v123 = vunpack.c.l.b16 %v66
    %v124 = vunpack.c.l.b16 %v67
    %v125 = vunpack.c.l.b16 %v68
    %v126 = vunpack.c.l.b16 %v69
    %v127 = vunpack.c.l.b16 %v70
    %v128 = vunpack.c.l.b16 %v71
    %v129 = vunpack.c.l.b16 %v72
    %v130 = vunpack.c.l.b16 %v73
    %v131 = vunpack.c.l.b16 %v74
    %v132 = vunpack.c.l.b16 %v75
    %v133 = vunpack.c.l.b16 %v76
    %v134 = vpack.c.b16 %v119, %v118
    %v135 = vpack.c.b16 %v121, %v120
    %v136 = vpack.c.b16 %v123, %v122
    %v137 = vpack.c.b16 %v125, %v124
    %v138 = vpack.c.b16 %v127, %v126
    %v139 = vpack.c.b16 %v129, %v128
    %v140 = vpack.c.b16 %v131, %v130
    %v141 = vpack.c.b16 %v133, %v132
    %150 = vmatprep.subr.bf16.mxu0 0
    %151 = vmatpush1.bf16.msra.mxu0 %v134
    %152 = vmatprep.subr.bf16.mxu0 0
    %153 = vmatpush1.bf16.msra.mxu0 %v135
    %154 = vmatprep.subr.bf16.mxu0 0
    %155 = vmatpush1.bf16.msra.mxu0 %v136
    %156 = vmatprep.subr.bf16.mxu0 0
    %157 = vmatpush1.bf16.msra.mxu0 %v137
    %158 = vmatprep.subr.bf16.mxu0 0
    %159 = vmatpush1.bf16.msra.mxu0 %v138
    %160 = vmatprep.subr.bf16.mxu0 0
    %161 = vmatpush1.bf16.msra.mxu0 %v139
    %162 = vmatprep.subr.bf16.mxu0 0
    %163 = vmatpush1.bf16.msra.mxu0 %v140
    %164 = vmatprep.subr.bf16.mxu0 0
    %165 = vmatpush1.bf16.msra.mxu0 %v141
    %166 = vmatprep.subr.bf16.mxu0 0
    %167 = vmatpush1.bf16.msra.mxu0 0
    %168 = vmatprep.subr.bf16.mxu0 0
    %169 = vmatpush1.bf16.msra.mxu0 0
    %170 = vmatprep.subr.bf16.mxu0 0
    %171 = vmatpush1.bf16.msra.mxu0 0
    %172 = vmatprep.subr.bf16.mxu0 0
    %173 = vmatpush1.bf16.msra.mxu0 0
    %174 = vmatprep.subr.bf16.mxu0 0
    %175 = vmatpush1.bf16.msra.mxu0 0
    %176 = vmatprep.subr.bf16.mxu0 0
    %177 = vmatpush1.bf16.msra.mxu0 0
    %178 = vmatprep.subr.bf16.mxu0 0
    %179 = vmatpush1.bf16.msra.mxu0 0
    %180 = vmatprep.subr.bf16.mxu0 0
    %181 = vmatpush1.bf16.msra.mxu0 0
    %182 = vmatprep.mubr.bf16.mxu0 0
    %183 = vmatmul.mubr.bf16.gmra.mrb[0].mxu0 %v95
    %v184 = vpop.f32.mrb[0].mxu0
    %v185 = vadd.f32 %v100, %v184
    %v186 = vpop.f32.mrb[0].mxu0
    %v187 = vpop.f32.mrb[0].mxu0
    %v188 = vpop.f32.mrb[0].mxu0
    %189 = vdwg.mxu0
    %v190 = vmax.f32 %v185, 0.0
    %v191 = vpack.c.bf16 %v190, %v190
    %v193 = vlaneseq
    %v194 = vshrl.u32 %v193, 7
    %v195 = vsub.s32 0, %v194
    %v196 = vrot.slane %v94, %v195
    %v214 = vunpack.c.l.b16 %v78
    %v215 = vunpack.c.l.b16 %v79
    %v216 = vunpack.c.l.b16 %v80
    %v217 = vunpack.c.l.b16 %v81
    %v218 = vunpack.c.l.b16 %v82
    %v219 = vunpack.c.l.b16 %v83
    %v220 = vunpack.c.l.b16 %v84
    %v221 = vunpack.c.l.b16 %v85
    %v222 = vunpack.c.l.b16 %v86
    %v223 = vunpack.c.l.b16 %v87
    %v224 = vunpack.c.l.b16 %v88
    %v225 = vunpack.c.l.b16 %v89
    %v226 = vunpack.c.l.b16 %v90
    %v227 = vunpack.c.l.b16 %v91
    %v228 = vunpack.c.l.b16 %v92
    %v229 = vunpack.c.l.b16 %v93
    %v230 = vpack.c.b16 %v215, %v214
    %v231 = vpack.c.b16 %v217, %v216
    %v232 = vpack.c.b16 %v219, %v218
    %v233 = vpack.c.b16 %v221, %v220
    %v234 = vpack.c.b16 %v223, %v222
    %v235 = vpack.c.b16 %v225, %v224
    %v236 = vpack.c.b16 %v227, %v226
    %v237 = vpack.c.b16 %v229, %v228
    %246 = vmatprep.subr.bf16.mxu0 0
    %247 = vmatpush1.bf16.msra.mxu0 %v230
    %248 = vmatprep.subr.bf16.mxu0 0
    %249 = vmatpush1.bf16.msra.mxu0 %v231
    %250 = vmatprep.subr.bf16.mxu0 0
    %251 = vmatpush1.bf16.msra.mxu0 %v232
    %252 = vmatprep.subr.bf16.mxu0 0
    %253 = vmatpush1.bf16.msra.mxu0 %v233
    %254 = vmatprep.subr.bf16.mxu0 0
    %255 = vmatpush1.bf16.msra.mxu0 %v234
    %256 = vmatprep.subr.bf16.mxu0 0
    %257 = vmatpush1.bf16.msra.mxu0 %v235
    %258 = vmatprep.subr.bf16.mxu0 0
    %259 = vmatpush1.bf16.msra.mxu0 %v236
    %260 = vmatprep.subr.bf16.mxu0 0
    %261 = vmatpush1.bf16.msra.mxu0 %v237
    %262 = vmatprep.subr.bf16.mxu0 0
    %263 = vmatpush1.bf16.msra.mxu0 0
    %264 = vmatprep.subr.bf16.mxu0 0
    %265 = vmatpush1.bf16.msra.mxu0 0
    %266 = vmatprep.subr.bf16.mxu0 0
    %267 = vmatpush1.bf16.msra.mxu0 0
    %268 = vmatprep.subr.bf16.mxu0 0
    %269 = vmatpush1.bf16.msra.mxu0 0
    %270 = vmatprep.subr.bf16.mxu0 0
    %271 = vmatpush1.bf16.msra.mxu0 0
    %272 = vmatprep.subr.bf16.mxu0 0
    %273 = vmatpush1.bf16.msra.mxu0 0
    %274 = vmatprep.subr.bf16.mxu0 0
    %275 = vmatpush1.bf16.msra.mxu0 0
    %276 = vmatprep.subr.bf16.mxu0 0
    %277 = vmatpush1.bf16.msra.mxu0 0
    %278 = vmatprep.mubr.bf16.mxu0 0
    %279 = vmatmul.mubr.bf16.gmra.mrb[0].mxu0 %v191
    %v280 = vpop.f32.mrb[0].mxu0
    %v281 = vadd.f32 %v196, %v280
    %v282 = vpop.f32.mrb[0].mxu0
    %v283 = vpop.f32.mrb[0].mxu0
    %v284 = vpop.f32.mrb[0].mxu0
    %285 = vdwg.mxu0
    %v286 = vmul.f32 %v281, %v281
    %287 = vadd.xlane.f32.xlu0 %v286
    %v288 = vpop.xlane.xlu0 %287
    %v289 = vmax.f32 %v288, 1e-24
    %v290 = vrsqrt.pop %v289
    %v291 = vmul.f32 %v281, %v290
    %292 = vst [vmem:[#allocation8] sm:$0xff] %v291
    // Predicated region
    $region34: #{tpu_custom_call.1} parent=1 // pred_check
      _
    $region35: #{tpu_custom_call.1} parent=1 // pred_check_branch
      %294 = sbr.rel (0) target = $region37
    $region36: #{tpu_custom_call.1} parent=1 // pred_region
      %s296 = ssub.s32 128, 128
      %297 = vsyncadd [#allocation4], %s296
      %s299 = sshll.u32 [#allocation8], 4
      %s300 = int_to_ptr.vmem [resolvable:$true] %s299
      %302 = dma.vmem_to_hbm [thread:$0]  %s300, 128, %s5, [#allocation4]
    $region37: #{tpu_custom_call.1} parent=1 // pred_fallthru
      _
    // Predicated region
    $region38: #{tpu_custom_call.1} parent=1 // pred_check
      _
    $region39: #{tpu_custom_call.1} parent=1 // pred_check_branch
      %304 = sbr.rel (0) target = $region41
    $region40: #{tpu_custom_call.1} parent=1 // pred_region
      %305 = dma.done [#allocation4], 128
    $region41: #{tpu_custom_call.1} parent=1 // pred_fallthru
      _
    %306 = vsyncpa [#allocation3], 1
    %307 = vsyncpa [#allocation6], 1
    %308 = vsyncpa [#allocation4], 1

// kernel: tpu_custom_call.1
$region0: #{tpu_custom_call.1}
  #allocation0 [shape = 'u32[]', space=smem, size = 0x4, offset = 0x4, fixed_abs, tag = 'smem constant byte address 0x4 - core index']
  #allocation1 [shape = 'u32[144,128]{1,0:T(1,128)}', space=vmem, size = 0x12000, scoped, tag = 'internal scratch']
  %s0 = inlined_call_operand.hbm [shape: bf16[8,128], index: 0, kind: input, shape index: {}]
  %s1 = inlined_call_operand.hbm [shape: bf16[128,128], index: 1, kind: input, shape index: {}]
  %s2 = inlined_call_operand.vmem [shape: f32[1,128], index: 2, kind: input, shape index: {}]
  %s3 = inlined_call_operand.hbm [shape: bf16[128,128], index: 3, kind: input, shape index: {}]
  %s4 = inlined_call_operand.vmem [shape: f32[1,128], index: 4, kind: input, shape index: {}]
  %s5 = inlined_call_operand.hbm [shape: f32[8,128], index: 5, kind: output, shape index: {}]
  %s6 = sld [smem:[#allocation0]]
  $region42: #{tpu_custom_call.1} parent=0
    _
  %s8 = ssub.s32 1, %s6
  %s9 = scalar_select 0, %s8, %s6
  $region1: #{tpu_custom_call.1} parent=0
    #allocation2 [shape = 'u8[2048]{0}', space=vmem, size = 0x800, scoped, tag = 'input window, operand 0, single buffered']
    #allocation3 [shape = 's32[1]{0}', space=sflag, size = 0x4, scoped, tag = 'scoped memory for tpu_custom_call.1']
    #allocation4 [shape = 's32[1]{0}', space=sflag, size = 0x4, scoped, tag = 'scoped memory for tpu_custom_call.1']
    #allocation5 [shape = 'u8[32768]{0}', space=vmem, size = 0x8000, scoped, tag = 'input window, operand 1, single buffered']
    #allocation6 [shape = 's32[1]{0}', space=sflag, size = 0x4, scoped, tag = 'scoped memory for tpu_custom_call.1']
    #allocation7 [shape = 'u8[32768]{0}', space=vmem, size = 0x8000, scoped, tag = 'input window, operand 3, single buffered']
    #allocation8 [shape = 'u8[4096]{0}', space=vmem, size = 0x1000, scoped, tag = 'output window, operand 0, single buffered']
    %10 = vsyncpa [#allocation3], 0
    %11 = vsyncpa [#allocation6], 0
    %12 = vsyncpa [#allocation4], 0
    // Predicated region
    $region2: #{tpu_custom_call.1} parent=1 // pred_check
      _
    $region3: #{tpu_custom_call.1} parent=1 // pred_check_branch
      %14 = sbr.rel (0) target = $region5
    $region4: #{tpu_custom_call.1} parent=1 // pred_region
      %s16 = ssub.s32 64, 64
      %17 = vsyncadd [#allocation3], %s16
      %s19 = sshll.u32 [#allocation2], 4
      %s20 = int_to_ptr.vmem [resolvable:$true] %s19
      %22 = dma.hbm_to_vmem [thread:$0]  %s0, 64, %s20, [#allocation3]
    $region5: #{tpu_custom_call.1} parent=1 // pred_fallthru
      _
    // Predicated region
    $region6: #{tpu_custom_call.1} parent=1 // pred_check
      _
    $region7: #{tpu_custom_call.1} parent=1 // pred_check_branch
      %24 = sbr.rel (0) target = $region9
    $region8: #{tpu_custom_call.1} parent=1 // pred_region
      %s26 = ssub.s32 1024, 1024
      %27 = vsyncadd [#allocation6], %s26
      %s28 = sshll.u32 [#allocation5], 4
      %s29 = int_to_ptr.vmem [resolvable:$true] %s28
      %34 = dma.hbm_to_vmem [thread:$0]  %s1, 1024, %s29, [#allocation6], 64, 64, 4
    $region9: #{tpu_custom_call.1} parent=1 // pred_fallthru
      _
    // Predicated region
    $region10: #{tpu_custom_call.1} parent=1 // pred_check
      _
    $region11: #{tpu_custom_call.1} parent=1 // pred_check_branch
      %36 = sbr.rel (0) target = $region13
    $region12: #{tpu_custom_call.1} parent=1 // pred_region
      _
    $region13: #{tpu_custom_call.1} parent=1 // pred_fallthru
      _
    // Predicated region
    $region14: #{tpu_custom_call.1} parent=1 // pred_check
      _
    $region15: #{tpu_custom_call.1} parent=1 // pred_check_branch
      %38 = sbr.rel (0) target = $region17
    $region16: #{tpu_custom_call.1} parent=1 // pred_region
      %s40 = ssub.s32 1024, 1024
      %41 = vsyncadd [#allocation6], %s40
      %s42 = sshll.u32 [#allocation7], 4
      %s43 = int_to_ptr.vmem [resolvable:$true] %s42
      %48 = dma.hbm_to_vmem [thread:$0]  %s3, 1024, %s43, [#allocation6], 64, 64, 4
    $region17: #{tpu_custom_call.1} parent=1 // pred_fallthru
      _
    // Predicated region
    $region18: #{tpu_custom_call.1} parent=1 // pred_check
      _
    $region19: #{tpu_custom_call.1} parent=1 // pred_check_branch
      %50 = sbr.rel (0) target = $region21
    $region20: #{tpu_custom_call.1} parent=1 // pred_region
      _
    $region21: #{tpu_custom_call.1} parent=1 // pred_fallthru
      _
    // Predicated region
    $region22: #{tpu_custom_call.1} parent=1 // pred_check
      _
    $region23: #{tpu_custom_call.1} parent=1 // pred_check_branch
      %52 = sbr.rel (0) target = $region25
    $region24: #{tpu_custom_call.1} parent=1 // pred_region
      %53 = dma.done [#allocation3], 64
    $region25: #{tpu_custom_call.1} parent=1 // pred_fallthru
      _
    // Predicated region
    $region26: #{tpu_custom_call.1} parent=1 // pred_check
      _
    $region27: #{tpu_custom_call.1} parent=1 // pred_check_branch
      %55 = sbr.rel (0) target = $region29
    $region28: #{tpu_custom_call.1} parent=1 // pred_region
      %56 = dma.done [#allocation6], 1024
    $region29: #{tpu_custom_call.1} parent=1 // pred_fallthru
      _
    // Predicated region
    $region30: #{tpu_custom_call.1} parent=1 // pred_check
      _
    $region31: #{tpu_custom_call.1} parent=1 // pred_check_branch
      %58 = sbr.rel (0) target = $region33
    $region32: #{tpu_custom_call.1} parent=1 // pred_region
      %59 = dma.done [#allocation6], 1024
    $region33: #{tpu_custom_call.1} parent=1 // pred_fallthru
      _
    %v61 = vld [vmem:[#allocation5] sm:$0xf]
    %v62 = vld [vmem:[#allocation5 + $0x4] sm:$0xf]
    %v63 = vld [vmem:[#allocation5 + $0x8] sm:$0xf]
    %v64 = vld [vmem:[#allocation5 + $0xc] sm:$0xf]
    %v65 = vld [vmem:[#allocation5 + $0x10] sm:$0xf]
    %v66 = vld [vmem:[#allocation5 + $0x14] sm:$0xf]
    %v67 = vld [vmem:[#allocation5 + $0x18] sm:$0xf]
    %v68 = vld [vmem:[#allocation5 + $0x1c] sm:$0xf]
    %v69 = vld [vmem:[#allocation5 + $0x20] sm:$0xf]
    %v70 = vld [vmem:[#allocation5 + $0x24] sm:$0xf]
    %v71 = vld [vmem:[#allocation5 + $0x28] sm:$0xf]
    %v72 = vld [vmem:[#allocation5 + $0x2c] sm:$0xf]
    %v73 = vld [vmem:[#allocation5 + $0x30] sm:$0xf]
    %v74 = vld [vmem:[#allocation5 + $0x34] sm:$0xf]
    %v75 = vld [vmem:[#allocation5 + $0x38] sm:$0xf]
    %v76 = vld [vmem:[#allocation5 + $0x3c] sm:$0xf]
    %v77 = vld [vmem:[%s2] sm:$0x1]
    %v78 = vld [vmem:[#allocation7] sm:$0xf]
    %v79 = vld [vmem:[#allocation7 + $0x4] sm:$0xf]
    %v80 = vld [vmem:[#allocation7 + $0x8] sm:$0xf]
    %v81 = vld [vmem:[#allocation7 + $0xc] sm:$0xf]
    %v82 = vld [vmem:[#allocation7 + $0x10] sm:$0xf]
    %v83 = vld [vmem:[#allocation7 + $0x14] sm:$0xf]
    %v84 = vld [vmem:[#allocation7 + $0x18] sm:$0xf]
    %v85 = vld [vmem:[#allocation7 + $0x1c] sm:$0xf]
    %v86 = vld [vmem:[#allocation7 + $0x20] sm:$0xf]
    %v87 = vld [vmem:[#allocation7 + $0x24] sm:$0xf]
    %v88 = vld [vmem:[#allocation7 + $0x28] sm:$0xf]
    %v89 = vld [vmem:[#allocation7 + $0x2c] sm:$0xf]
    %v90 = vld [vmem:[#allocation7 + $0x30] sm:$0xf]
    %v91 = vld [vmem:[#allocation7 + $0x34] sm:$0xf]
    %v92 = vld [vmem:[#allocation7 + $0x38] sm:$0xf]
    %v93 = vld [vmem:[#allocation7 + $0x3c] sm:$0xf]
    %v94 = vld [vmem:[%s4] sm:$0x1]
    %v95 = vld [vmem:[#allocation2] sm:$0xf]
    %v97 = vlaneseq
    %v98 = vshrl.u32 %v97, 7
    %v99 = vsub.s32 0, %v98
    %v100 = vrot.slane %v77, %v99
    %v118 = vunpack.c.l.b16 %v61
    %v119 = vunpack.c.l.b16 %v62
    %v120 = vunpack.c.l.b16 %v63
    %v121 = vunpack.c.l.b16 %v64
    %v122 = vunpack.c.l.b16 %v65
    %v123 = vunpack.c.l.b16 %v66
    %v124 = vunpack.c.l.b16 %v67
    %v125 = vunpack.c.l.b16 %v68
    %v126 = vunpack.c.l.b16 %v69
    %v127 = vunpack.c.l.b16 %v70
    %v128 = vunpack.c.l.b16 %v71
    %v129 = vunpack.c.l.b16 %v72
    %v130 = vunpack.c.l.b16 %v73
    %v131 = vunpack.c.l.b16 %v74
    %v132 = vunpack.c.l.b16 %v75
    %v133 = vunpack.c.l.b16 %v76
    %v134 = vpack.c.b16 %v119, %v118
    %v135 = vpack.c.b16 %v121, %v120
    %v136 = vpack.c.b16 %v123, %v122
    %v137 = vpack.c.b16 %v125, %v124
    %v138 = vpack.c.b16 %v127, %v126
    %v139 = vpack.c.b16 %v129, %v128
    %v140 = vpack.c.b16 %v131, %v130
    %v141 = vpack.c.b16 %v133, %v132
    %150 = vmatprep.subr.bf16.mxu0 0
    %151 = vmatpush1.bf16.msra.mxu0 %v134
    %152 = vmatprep.subr.bf16.mxu0 0
    %153 = vmatpush1.bf16.msra.mxu0 %v135
    %154 = vmatprep.subr.bf16.mxu0 0
    %155 = vmatpush1.bf16.msra.mxu0 %v136
    %156 = vmatprep.subr.bf16.mxu0 0
    %157 = vmatpush1.bf16.msra.mxu0 %v137
    %158 = vmatprep.subr.bf16.mxu0 0
    %159 = vmatpush1.bf16.msra.mxu0 %v138
    %160 = vmatprep.subr.bf16.mxu0 0
    %161 = vmatpush1.bf16.msra.mxu0 %v139
    %162 = vmatprep.subr.bf16.mxu0 0
    %163 = vmatpush1.bf16.msra.mxu0 %v140
    %164 = vmatprep.subr.bf16.mxu0 0
    %165 = vmatpush1.bf16.msra.mxu0 %v141
    %166 = vmatprep.subr.bf16.mxu0 0
    %167 = vmatpush1.bf16.msra.mxu0 0
    %168 = vmatprep.subr.bf16.mxu0 0
    %169 = vmatpush1.bf16.msra.mxu0 0
    %170 = vmatprep.subr.bf16.mxu0 0
    %171 = vmatpush1.bf16.msra.mxu0 0
    %172 = vmatprep.subr.bf16.mxu0 0
    %173 = vmatpush1.bf16.msra.mxu0 0
    %174 = vmatprep.subr.bf16.mxu0 0
    %175 = vmatpush1.bf16.msra.mxu0 0
    %176 = vmatprep.subr.bf16.mxu0 0
    %177 = vmatpush1.bf16.msra.mxu0 0
    %178 = vmatprep.subr.bf16.mxu0 0
    %179 = vmatpush1.bf16.msra.mxu0 0
    %180 = vmatprep.subr.bf16.mxu0 0
    %181 = vmatpush1.bf16.msra.mxu0 0
    %182 = vmatprep.mubr.bf16.mxu0 0
    %183 = vmatmul.mubr.bf16.gmra.mrb[0].mxu0 %v95
    %v184 = vpop.f32.mrb[0].mxu0
    %v185 = vadd.f32 %v100, %v184
    %v186 = vpop.f32.mrb[0].mxu0
    %v187 = vpop.f32.mrb[0].mxu0
    %v188 = vpop.f32.mrb[0].mxu0
    %189 = vdwg.mxu0
    %v190 = vmax.f32 %v185, 0.0
    %v191 = vpack.c.bf16 %v190, %v190
    %v193 = vlaneseq
    %v194 = vshrl.u32 %v193, 7
    %v195 = vsub.s32 0, %v194
    %v196 = vrot.slane %v94, %v195
    %v214 = vunpack.c.l.b16 %v78
    %v215 = vunpack.c.l.b16 %v79
    %v216 = vunpack.c.l.b16 %v80
    %v217 = vunpack.c.l.b16 %v81
    %v218 = vunpack.c.l.b16 %v82
    %v219 = vunpack.c.l.b16 %v83
    %v220 = vunpack.c.l.b16 %v84
    %v221 = vunpack.c.l.b16 %v85
    %v222 = vunpack.c.l.b16 %v86
    %v223 = vunpack.c.l.b16 %v87
    %v224 = vunpack.c.l.b16 %v88
    %v225 = vunpack.c.l.b16 %v89
    %v226 = vunpack.c.l.b16 %v90
    %v227 = vunpack.c.l.b16 %v91
    %v228 = vunpack.c.l.b16 %v92
    %v229 = vunpack.c.l.b16 %v93
    %v230 = vpack.c.b16 %v215, %v214
    %v231 = vpack.c.b16 %v217, %v216
    %v232 = vpack.c.b16 %v219, %v218
    %v233 = vpack.c.b16 %v221, %v220
    %v234 = vpack.c.b16 %v223, %v222
    %v235 = vpack.c.b16 %v225, %v224
    %v236 = vpack.c.b16 %v227, %v226
    %v237 = vpack.c.b16 %v229, %v228
    %246 = vmatprep.subr.bf16.mxu0 0
    %247 = vmatpush1.bf16.msra.mxu0 %v230
    %248 = vmatprep.subr.bf16.mxu0 0
    %249 = vmatpush1.bf16.msra.mxu0 %v231
    %250 = vmatprep.subr.bf16.mxu0 0
    %251 = vmatpush1.bf16.msra.mxu0 %v232
    %252 = vmatprep.subr.bf16.mxu0 0
    %253 = vmatpush1.bf16.msra.mxu0 %v233
    %254 = vmatprep.subr.bf16.mxu0 0
    %255 = vmatpush1.bf16.msra.mxu0 %v234
    %256 = vmatprep.subr.bf16.mxu0 0
    %257 = vmatpush1.bf16.msra.mxu0 %v235
    %258 = vmatprep.subr.bf16.mxu0 0
    %259 = vmatpush1.bf16.msra.mxu0 %v236
    %260 = vmatprep.subr.bf16.mxu0 0
    %261 = vmatpush1.bf16.msra.mxu0 %v237
    %262 = vmatprep.subr.bf16.mxu0 0
    %263 = vmatpush1.bf16.msra.mxu0 0
    %264 = vmatprep.subr.bf16.mxu0 0
    %265 = vmatpush1.bf16.msra.mxu0 0
    %266 = vmatprep.subr.bf16.mxu0 0
    %267 = vmatpush1.bf16.msra.mxu0 0
    %268 = vmatprep.subr.bf16.mxu0 0
    %269 = vmatpush1.bf16.msra.mxu0 0
    %270 = vmatprep.subr.bf16.mxu0 0
    %271 = vmatpush1.bf16.msra.mxu0 0
    %272 = vmatprep.subr.bf16.mxu0 0
    %273 = vmatpush1.bf16.msra.mxu0 0
    %274 = vmatprep.subr.bf16.mxu0 0
    %275 = vmatpush1.bf16.msra.mxu0 0
    %276 = vmatprep.subr.bf16.mxu0 0
    %277 = vmatpush1.bf16.msra.mxu0 0
    %278 = vmatprep.mubr.bf16.mxu0 0
    %279 = vmatmul.mubr.bf16.gmra.mrb[0].mxu0 %v191
    %v280 = vpop.f32.mrb[0].mxu0
    %v281 = vadd.f32 %v196, %v280
    %v282 = vpop.f32.mrb[0].mxu0
    %v283 = vpop.f32.mrb[0].mxu0
    %v284 = vpop.f32.mrb[0].mxu0
    %285 = vdwg.mxu0
    %v286 = vmul.f32 %v281, %v281
    %287 = vadd.xlane.f32.xlu0 %v286
    %v288 = vpop.xlane.xlu0 %287
    %v289 = vmax.f32 %v288, 1e-24
    %v290 = vrsqrt.pop %v289
    %v291 = vmul.f32 %v281, %v290
    %292 = vst [vmem:[#allocation8] sm:$0xff] %v291
    // Predicated region
    $region34: #{tpu_custom_call.1} parent=1 // pred_check
      _
    $region35: #{tpu_custom_call.1} parent=1 // pred_check_branch
      %294 = sbr.rel (0) target = $region37
    $region36: #{tpu_custom_call.1} parent=1 // pred_region
      %s296 = ssub.s32 128, 128
      %297 = vsyncadd [#allocation4], %s296
      %s299 = sshll.u32 [#allocation8], 4
      %s300 = int_to_ptr.vmem [resolvable:$true] %s299
      %302 = dma.vmem_to_hbm [thread:$0]  %s300, 128, %s5, [#allocation4]
    $region37: #{tpu_custom_call.1} parent=1 // pred_fallthru
      _
    // Predicated region
    $region38: #{tpu_custom_call.1} parent=1 // pred_check
      _
    $region39: #{tpu_custom_call.1} parent=1 // pred_check_branch
      %304 = sbr.rel (0) target = $region41
    $region40: #{tpu_custom_call.1} parent=1 // pred_region
      %305 = dma.done [#allocation4], 128
    $region41: #{tpu_custom_call.1} parent=1 // pred_fallthru
      _
    %306 = vsyncpa [#allocation3], 1
    %307 = vsyncpa [#allocation6], 1
    %308 = vsyncpa [#allocation4], 1

</llo_original>
